<compile_context>
chip_gen: v7x
topology: tpu7x:2x2x1
jax: 0.10.0
libtpu: 0.0.40
codegen_flags: <defaults>
</compile_context>

<pallas_src>
import jax
import jax.numpy as jnp
from jax.experimental import pallas as pl
from jax.experimental.pallas import tpu as pltpu

# ---- Config constants (from the PyTorch module) ----
STATE_DIM = 1
ACTION_DIM = 1
EPSILON_MIN = 1.0
EPSILON_MAX = 5.0
H1 = 128
H2 = 64
LN_EPS = 1e-5  # torch.nn.LayerNorm default


def _elu(h):
    # ELU(alpha=1).  exp() is evaluated on min(h, 0) so the unselected branch
    # never produces inf / wasted EUP work for large positive h.
    # TODO(synk): switch to jnp.expm1 for bit-exact torch ELU numerics once
    # confirmed supported by the Mosaic lowering of the target jax version.
    return jnp.where(h > 0, h, jnp.exp(jnp.minimum(h, 0.0)) - 1.0)


def _layernorm_axis0(h, gamma, beta, n):
    # Fused LayerNorm over the feature (sublane) axis: one sweep computes
    # sum(h) and sum(h*h); mean/var derived from those (saves a full-tile
    # VPU pass vs. the two-pass mean / centered-variance form).
    s1 = jnp.sum(h, axis=0, keepdims=True)
    s2 = jnp.sum(h * h, axis=0, keepdims=True)
    inv_n = 1.0 / n
    mu = s1 * inv_n
    var = jnp.maximum(s2 * inv_n - mu * mu, 0.0)
    return (h - mu) * jax.lax.rsqrt(var + LN_EPS) * gamma + beta


def actor_kernel(x_ref, w1_ref, b1_ref, g1_ref, be1_ref,
                 w2_ref, b2_ref, g2_ref, be2_ref,
                 w3_ref, b3_ref, out_ref):
    tb = x_ref.shape[-1]
    x = x_ref[...].reshape(1, tb).astype(jnp.float32)       # (1, TB), batch on lanes

    # Linear(1 -> 128): K == 1, exact broadcasted multiply (no MXU needed).
    # Relies on w1 being stored as a (128, 1) feature column.
    h = x * w1_ref[...] + b1_ref[...]                        # (128, TB)
    h = _elu(_layernorm_axis0(h, g1_ref[...], be1_ref[...], float(H1)))

    # Linear(128 -> 64) on the MXU: (64, 128) @ (128, TB).
    h = jnp.dot(w2_ref[...], h, preferred_element_type=jnp.float32) + b2_ref[...]
    h = _elu(_layernorm_axis0(h, g2_ref[...], be2_ref[...], float(H2)))

    # Linear(64 -> 1) + Tanh: VPU multiply + cross-sublane reduction instead
    # of a degenerate (TB,64)@(64,1) MXU pass.
    y = jnp.sum(h * w3_ref[...], axis=0, keepdims=True) + b3_ref[...]    # (1, TB)
    y = jnp.tanh(y)

    eps = (y + 1.0) * (0.5 * (EPSILON_MAX - EPSILON_MIN)) + EPSILON_MIN
    eps = jnp.clip(eps, EPSILON_MIN, EPSILON_MAX)            # guards fp rounding only
    out_ref[...] = eps.reshape(1, 1, tb).astype(out_ref.dtype)


def prepare_params(torch_params):
    """Convert PyTorch-convention (out, in) params to the kernel's
    feature-major layout (feature columns / (out, in) matmul matrix)."""
    w1, b1, g1, be1, w2, b2, g2, be2, w3, b3 = torch_params
    assert STATE_DIM == 1 and ACTION_DIM == 1
    assert tuple(w1.shape) == (H1, STATE_DIM), "w1 must be (128, 1), torch (out, in)"
    assert tuple(w2.shape) == (H2, H1), "w2 must be (64, 128), torch (out, in)"
    assert tuple(w3.shape) == (ACTION_DIM, H2), "w3 must be (1, 64), torch (out, in)"

    col = lambda v, n: jnp.asarray(v, jnp.float32).reshape(n, 1)
    return (col(w1, H1), col(b1, H1), col(g1, H1), col(be1, H1),
            jnp.asarray(w2, jnp.float32),
            col(b2, H2), col(g2, H2), col(be2, H2),
            col(w3, H2), jnp.asarray(b3, jnp.float32).reshape(1, 1))


def actor_forward(state, torch_params, *, tb=1024):
    """state: (B, STATE_DIM) float32 -> (B, ACTION_DIM) float32."""
    assert state.ndim == 2 and state.shape[1] == STATE_DIM
    B = state.shape[0]
    kparams = prepare_params(torch_params)

    # Batch tile: lane-dense (multiple of 128), large enough to amortize the
    # ~0.35us per-grid-step overhead; for large batches prefer >= 2 grid steps
    # so the ("parallel",) grid shards across both v7x TensorCores.
    tb = max(128, (tb // 128) * 128)
    half = ((((B + 1) // 2) + 127) // 128) * 128
    tb_eff = min(tb, max(128, half))
    b_pad = ((B + tb_eff - 1) // tb_eff) * tb_eff
    grid = b_pad // tb_eff

    x = jnp.asarray(state, jnp.float32).reshape(B)
    if b_pad != B:
        x = jnp.pad(x, (0, b_pad - B))
    x = x.reshape(grid, 1, tb_eff)

    full = lambda arr: pl.BlockSpec(arr.shape, lambda i: (0, 0))
    param_bytes = sum(int(p.size) * 4 for p in kparams)
    cost = pl.CostEstimate(
        flops=2 * b_pad * H1 * H2 + 12 * b_pad * (H1 + H2),
        transcendentals=b_pad * (H1 + H2 + 3),
        bytes_accessed=8 * b_pad + param_bytes,
    )

    out3 = pl.pallas_call(
        actor_kernel,
        out_shape=jax.ShapeDtypeStruct((grid, 1, tb_eff), jnp.float32),
        grid_spec=pltpu.PrefetchScalarGridSpec(
            num_scalar_prefetch=0,
            grid=(grid,),
            in_specs=[pl.BlockSpec((1, 1, tb_eff), lambda i: (i, 0, 0))]
                     + [full(p) for p in kparams],
            out_specs=pl.BlockSpec((1, 1, tb_eff), lambda i: (i, 0, 0)),
        ),
        compiler_params=pltpu.CompilerParams(
            dimension_semantics=("parallel",)),
        cost_estimate=cost,
    )(x, *kparams)

    return out3.reshape(b_pad)[:B].reshape(B, ACTION_DIM)


def init_params(key):
    """Deterministic init mimicking torch.nn.Linear defaults; weights are
    stored in torch (out, in) convention."""
    ks = jax.random.split(key, 6)

    def lin(kw, kb, fan_in, fan_out):
        bound = 1.0 / jnp.sqrt(jnp.float32(fan_in))
        w = jax.random.uniform(kw, (fan_out, fan_in), jnp.float32, -bound, bound)
        b = jax.random.uniform(kb, (fan_out,), jnp.float32, -bound, bound)
        return w, b

    w1, b1 = lin(ks[0], ks[1], STATE_DIM, H1)
    w2, b2 = lin(ks[2], ks[3], H1, H2)
    w3, b3 = lin(ks[4], ks[5], H2, ACTION_DIM)
    g1, be1 = jnp.ones((H1,), jnp.float32), jnp.zeros((H1,), jnp.float32)
    g2, be2 = jnp.ones((H2,), jnp.float32), jnp.zeros((H2,), jnp.float32)
    return (w1, b1, g1, be1, w2, b2, g2, be2, w3, b3)


def actor_reference(state, torch_params):
    """Pure-JAX reference (batch-major, torch semantics) for correctness."""
    w1, b1, g1, be1, w2, b2, g2, be2, w3, b3 = torch_params

    def ln(h, g, b):
        mu = jnp.mean(h, axis=-1, keepdims=True)
        var = jnp.mean((h - mu) ** 2, axis=-1, keepdims=True)
        return (h - mu) * jax.lax.rsqrt(var + LN_EPS) * g + b

    elu = lambda h: jnp.where(h > 0, h, jnp.expm1(h))
    h = elu(ln(state @ w1.T + b1, g1, be1))
    h = elu(ln(h @ w2.T + b2, g2, be2))
    y = jnp.tanh(h @ w3.T + b3)
    eps = (y + 1.0) * 0.5 * (EPSILON_MAX - EPSILON_MIN) + EPSILON_MIN
    return jnp.clip(eps, EPSILON_MIN, EPSILON_MAX)


if __name__ == "__main__":
    key = jax.random.PRNGKey(0)
    pkey, xkey = jax.random.split(key)
    params = init_params(pkey)

    B = 64  # small batch (Config.BATCH_SIZE); not a multiple of 128, so the
            # lane-padding path is exercised as well.
    state = jax.random.normal(xkey, (B, STATE_DIM), jnp.float32)

    out = jax.block_until_ready(actor_forward(state, params))
    ref = actor_reference(state, params)

    assert out.shape == (B, ACTION_DIM)
    assert bool(jnp.all(out >= EPSILON_MIN - 1e-5))
    assert bool(jnp.all(out <= EPSILON_MAX + 1e-5))
    # Default-precision MXU matmul + fused-variance LayerNorm introduce tiny
    # formulation differences vs. the pure-JAX reference.
    assert jnp.allclose(out, ref, atol=2e-4, rtol=2e-4), \
        float(jnp.max(jnp.abs(out - ref)))

    print("KERNEL_OK")
</pallas_src>

<mosaic_0001>
module attributes {stable_mosaic.version = 11 : i64} {
  func.func @actor_kernel(%arg0: i32, %arg1: memref<1x1x128xf32, #tpu.memory_space<vmem>>, %arg2: memref<128x1xf32, #tpu.memory_space<vmem>>, %arg3: memref<128x1xf32, #tpu.memory_space<vmem>>, %arg4: memref<128x1xf32, #tpu.memory_space<vmem>>, %arg5: memref<128x1xf32, #tpu.memory_space<vmem>>, %arg6: memref<64x128xf32, #tpu.memory_space<vmem>>, %arg7: memref<64x1xf32, #tpu.memory_space<vmem>>, %arg8: memref<64x1xf32, #tpu.memory_space<vmem>>, %arg9: memref<64x1xf32, #tpu.memory_space<vmem>>, %arg10: memref<64x1xf32, #tpu.memory_space<vmem>>, %arg11: memref<1x1xf32, #tpu.memory_space<vmem>>, %arg12: memref<1x1x128xf32, #tpu.memory_space<vmem>>) attributes {dimension_semantics = [#tpu.dimension_semantics<parallel>], iteration_bounds = array<i64: 1>, scalar_prefetch = 0 : i64, scratch_operands = 0 : i64, tpu.core_type = #tpu.core_type<tc>, window_params = [{transform_indices = @transform_0, window_bounds = array<i64: 1, 1, 128>}, {pipeline_mode = #tpu.pipeline_mode<synchronous>, transform_indices = @transform_1, window_bounds = array<i64: 128, 1>}, {pipeline_mode = #tpu.pipeline_mode<synchronous>, transform_indices = @transform_2, window_bounds = array<i64: 128, 1>}, {pipeline_mode = #tpu.pipeline_mode<synchronous>, transform_indices = @transform_3, window_bounds = array<i64: 128, 1>}, {pipeline_mode = #tpu.pipeline_mode<synchronous>, transform_indices = @transform_4, window_bounds = array<i64: 128, 1>}, {pipeline_mode = #tpu.pipeline_mode<synchronous>, transform_indices = @transform_5, window_bounds = array<i64: 64, 128>}, {pipeline_mode = #tpu.pipeline_mode<synchronous>, transform_indices = @transform_6, window_bounds = array<i64: 64, 1>}, {pipeline_mode = #tpu.pipeline_mode<synchronous>, transform_indices = @transform_7, window_bounds = array<i64: 64, 1>}, {pipeline_mode = #tpu.pipeline_mode<synchronous>, transform_indices = @transform_8, window_bounds = array<i64: 64, 1>}, {pipeline_mode = #tpu.pipeline_mode<synchronous>, transform_indices = @transform_9, window_bounds = array<i64: 64, 1>}, {pipeline_mode = #tpu.pipeline_mode<synchronous>, transform_indices = @transform_10, window_bounds = array<i64: 1, 1>}, {transform_indices = @transform_11, window_bounds = array<i64: 1, 1, 128>}]} {
    %c0 = arith.constant 0 : index
    %c0_0 = arith.constant 0 : index
    %c0_1 = arith.constant 0 : index
    %0 = vector.load %arg1[%c0, %c0_0, %c0_1] : memref<1x1x128xf32, #tpu.memory_space<vmem>>, vector<1x1x128xf32>
    %1 = vector.shape_cast %0 : vector<1x1x128xf32> to vector<1x128xf32>
    %c0_2 = arith.constant 0 : index
    %c0_3 = arith.constant 0 : index
    %2 = vector.load %arg2[%c0_2, %c0_3] : memref<128x1xf32, #tpu.memory_space<vmem>>, vector<128x1xf32>
    %3 = vector.broadcast %1 : vector<1x128xf32> to vector<128x128xf32>
    %4 = vector.broadcast %2 : vector<128x1xf32> to vector<128x128xf32>
    %5 = arith.mulf %3, %4 : vector<128x128xf32>
    %c0_4 = arith.constant 0 : index
    %c0_5 = arith.constant 0 : index
    %6 = vector.load %arg3[%c0_4, %c0_5] : memref<128x1xf32, #tpu.memory_space<vmem>>, vector<128x1xf32>
    %7 = vector.broadcast %6 : vector<128x1xf32> to vector<128x128xf32>
    %8 = arith.addf %5, %7 : vector<128x128xf32>
    %c0_6 = arith.constant 0 : index
    %c0_7 = arith.constant 0 : index
    %9 = vector.load %arg4[%c0_6, %c0_7] : memref<128x1xf32, #tpu.memory_space<vmem>>, vector<128x1xf32>
    %c0_8 = arith.constant 0 : index
    %c0_9 = arith.constant 0 : index
    %10 = vector.load %arg5[%c0_8, %c0_9] : memref<128x1xf32, #tpu.memory_space<vmem>>, vector<128x1xf32>
    %cst = arith.constant dense<0.000000e+00> : vector<128xf32>
    %11 = vector.multi_reduction <add>, %8, %cst [0] : vector<128x128xf32> to vector<128xf32>
    %12 = vector.shape_cast %11 : vector<128xf32> to vector<1x128xf32>
    %13 = arith.mulf %8, %8 : vector<128x128xf32>
    %cst_10 = arith.constant dense<0.000000e+00> : vector<128xf32>
    %14 = vector.multi_reduction <add>, %13, %cst_10 [0] : vector<128x128xf32> to vector<128xf32>
    %15 = vector.shape_cast %14 : vector<128xf32> to vector<1x128xf32>
    %cst_11 = arith.constant 7.812500e-03 : f32
    %16 = vector.broadcast %cst_11 : f32 to vector<1x128xf32>
    %17 = arith.mulf %12, %16 : vector<1x128xf32>
    %cst_12 = arith.constant 7.812500e-03 : f32
    %18 = vector.broadcast %cst_12 : f32 to vector<1x128xf32>
    %19 = arith.mulf %15, %18 : vector<1x128xf32>
    %20 = arith.mulf %17, %17 : vector<1x128xf32>
    %21 = arith.subf %19, %20 : vector<1x128xf32>
    %cst_13 = arith.constant 0.000000e+00 : f32
    %22 = vector.broadcast %cst_13 : f32 to vector<1x128xf32>
    %23 = arith.maximumf %21, %22 : vector<1x128xf32>
    %24 = vector.broadcast %17 : vector<1x128xf32> to vector<128x128xf32>
    %25 = arith.subf %8, %24 : vector<128x128xf32>
    %cst_14 = arith.constant 9.99999974E-6 : f32
    %26 = vector.broadcast %cst_14 : f32 to vector<1x128xf32>
    %27 = arith.addf %23, %26 : vector<1x128xf32>
    %28 = math.rsqrt %27 : vector<1x128xf32>
    %29 = vector.broadcast %28 : vector<1x128xf32> to vector<128x128xf32>
    %30 = arith.mulf %25, %29 : vector<128x128xf32>
    %31 = vector.broadcast %9 : vector<128x1xf32> to vector<128x128xf32>
    %32 = arith.mulf %30, %31 : vector<128x128xf32>
    %33 = vector.broadcast %10 : vector<128x1xf32> to vector<128x128xf32>
    %34 = arith.addf %32, %33 : vector<128x128xf32>
    %cst_15 = arith.constant 0.000000e+00 : f32
    %35 = vector.broadcast %cst_15 : f32 to vector<128x128xf32>
    %36 = arith.cmpf ogt, %34, %35 : vector<128x128xf32>
    %cst_16 = arith.constant 0.000000e+00 : f32
    %37 = vector.broadcast %cst_16 : f32 to vector<128x128xf32>
    %38 = arith.minimumf %34, %37 : vector<128x128xf32>
    %39 = math.exp %38 : vector<128x128xf32>
    %cst_17 = arith.constant 1.000000e+00 : f32
    %40 = vector.broadcast %cst_17 : f32 to vector<128x128xf32>
    %41 = arith.subf %39, %40 : vector<128x128xf32>
    %42 = arith.select %36, %34, %41 : vector<128x128xi1>, vector<128x128xf32>
    %c0_18 = arith.constant 0 : index
    %c0_19 = arith.constant 0 : index
    %43 = vector.load %arg6[%c0_18, %c0_19] : memref<64x128xf32, #tpu.memory_space<vmem>>, vector<64x128xf32>
    %cst_20 = arith.constant dense<0.000000e+00> : vector<64x128xf32>
    %44 = tpu.matmul %43, %42, %cst_20 {dimension_numbers = #tpu.dot_dimension_numbers<[1], [0], [0], [1], [0, 0, 1, 1], [], []>} : vector<64x128xf32>, vector<128x128xf32>, vector<64x128xf32> -> vector<64x128xf32>
    %c0_21 = arith.constant 0 : index
    %c0_22 = arith.constant 0 : index
    %45 = vector.load %arg7[%c0_21, %c0_22] : memref<64x1xf32, #tpu.memory_space<vmem>>, vector<64x1xf32>
    %46 = vector.broadcast %45 : vector<64x1xf32> to vector<64x128xf32>
    %47 = arith.addf %44, %46 : vector<64x128xf32>
    %c0_23 = arith.constant 0 : index
    %c0_24 = arith.constant 0 : index
    %48 = vector.load %arg8[%c0_23, %c0_24] : memref<64x1xf32, #tpu.memory_space<vmem>>, vector<64x1xf32>
    %c0_25 = arith.constant 0 : index
    %c0_26 = arith.constant 0 : index
    %49 = vector.load %arg9[%c0_25, %c0_26] : memref<64x1xf32, #tpu.memory_space<vmem>>, vector<64x1xf32>
    %cst_27 = arith.constant dense<0.000000e+00> : vector<128xf32>
    %50 = vector.multi_reduction <add>, %47, %cst_27 [0] : vector<64x128xf32> to vector<128xf32>
    %51 = vector.shape_cast %50 : vector<128xf32> to vector<1x128xf32>
    %52 = arith.mulf %47, %47 : vector<64x128xf32>
    %cst_28 = arith.constant dense<0.000000e+00> : vector<128xf32>
    %53 = vector.multi_reduction <add>, %52, %cst_28 [0] : vector<64x128xf32> to vector<128xf32>
    %54 = vector.shape_cast %53 : vector<128xf32> to vector<1x128xf32>
    %cst_29 = arith.constant 1.562500e-02 : f32
    %55 = vector.broadcast %cst_29 : f32 to vector<1x128xf32>
    %56 = arith.mulf %51, %55 : vector<1x128xf32>
    %cst_30 = arith.constant 1.562500e-02 : f32
    %57 = vector.broadcast %cst_30 : f32 to vector<1x128xf32>
    %58 = arith.mulf %54, %57 : vector<1x128xf32>
    %59 = arith.mulf %56, %56 : vector<1x128xf32>
    %60 = arith.subf %58, %59 : vector<1x128xf32>
    %cst_31 = arith.constant 0.000000e+00 : f32
    %61 = vector.broadcast %cst_31 : f32 to vector<1x128xf32>
    %62 = arith.maximumf %60, %61 : vector<1x128xf32>
    %63 = vector.broadcast %56 : vector<1x128xf32> to vector<64x128xf32>
    %64 = arith.subf %47, %63 : vector<64x128xf32>
    %cst_32 = arith.constant 9.99999974E-6 : f32
    %65 = vector.broadcast %cst_32 : f32 to vector<1x128xf32>
    %66 = arith.addf %62, %65 : vector<1x128xf32>
    %67 = math.rsqrt %66 : vector<1x128xf32>
    %68 = vector.broadcast %67 : vector<1x128xf32> to vector<64x128xf32>
    %69 = arith.mulf %64, %68 : vector<64x128xf32>
    %70 = vector.broadcast %48 : vector<64x1xf32> to vector<64x128xf32>
    %71 = arith.mulf %69, %70 : vector<64x128xf32>
    %72 = vector.broadcast %49 : vector<64x1xf32> to vector<64x128xf32>
    %73 = arith.addf %71, %72 : vector<64x128xf32>
    %cst_33 = arith.constant 0.000000e+00 : f32
    %74 = vector.broadcast %cst_33 : f32 to vector<64x128xf32>
    %75 = arith.cmpf ogt, %73, %74 : vector<64x128xf32>
    %cst_34 = arith.constant 0.000000e+00 : f32
    %76 = vector.broadcast %cst_34 : f32 to vector<64x128xf32>
    %77 = arith.minimumf %73, %76 : vector<64x128xf32>
    %78 = math.exp %77 : vector<64x128xf32>
    %cst_35 = arith.constant 1.000000e+00 : f32
    %79 = vector.broadcast %cst_35 : f32 to vector<64x128xf32>
    %80 = arith.subf %78, %79 : vector<64x128xf32>
    %81 = arith.select %75, %73, %80 : vector<64x128xi1>, vector<64x128xf32>
    %c0_36 = arith.constant 0 : index
    %c0_37 = arith.constant 0 : index
    %82 = vector.load %arg10[%c0_36, %c0_37] : memref<64x1xf32, #tpu.memory_space<vmem>>, vector<64x1xf32>
    %83 = vector.broadcast %82 : vector<64x1xf32> to vector<64x128xf32>
    %84 = arith.mulf %81, %83 : vector<64x128xf32>
    %cst_38 = arith.constant dense<0.000000e+00> : vector<128xf32>
    %85 = vector.multi_reduction <add>, %84, %cst_38 [0] : vector<64x128xf32> to vector<128xf32>
    %86 = vector.shape_cast %85 : vector<128xf32> to vector<1x128xf32>
    %c0_39 = arith.constant 0 : index
    %c0_40 = arith.constant 0 : index
    %87 = vector.load %arg11[%c0_39, %c0_40] : memref<1x1xf32, #tpu.memory_space<vmem>>, vector<1x1xf32>
    %88 = vector.broadcast %87 : vector<1x1xf32> to vector<1x128xf32>
    %89 = arith.addf %86, %88 : vector<1x128xf32>
    %90 = math.tanh %89 : vector<1x128xf32>
    %cst_41 = arith.constant 1.000000e+00 : f32
    %91 = vector.broadcast %cst_41 : f32 to vector<1x128xf32>
    %92 = arith.addf %90, %91 : vector<1x128xf32>
    %cst_42 = arith.constant 2.000000e+00 : f32
    %93 = vector.broadcast %cst_42 : f32 to vector<1x128xf32>
    %94 = arith.mulf %92, %93 : vector<1x128xf32>
    %cst_43 = arith.constant 1.000000e+00 : f32
    %95 = vector.broadcast %cst_43 : f32 to vector<1x128xf32>
    %96 = arith.addf %94, %95 : vector<1x128xf32>
    %cst_44 = arith.constant 1.000000e+00 : f32
    %cst_45 = arith.constant 5.000000e+00 : f32
    %97 = vector.broadcast %cst_44 : f32 to vector<1x128xf32>
    %98 = arith.maximumf %97, %96 : vector<1x128xf32>
    %99 = vector.broadcast %cst_45 : f32 to vector<1x128xf32>
    %100 = arith.minimumf %99, %98 : vector<1x128xf32>
    %101 = vector.shape_cast %100 : vector<1x128xf32> to vector<1x1x128xf32>
    %c0_46 = arith.constant 0 : index
    %c0_47 = arith.constant 0 : index
    %c0_48 = arith.constant 0 : index
    %102 = vector.load %arg12[%c0_46, %c0_47, %c0_48] : memref<1x1x128xf32, #tpu.memory_space<vmem>>, vector<1x1x128xf32>
    tpu.vector_store %arg12[%c0_46, %c0_47, %c0_48], %101 {strides = array<i32>} : memref<1x1x128xf32, #tpu.memory_space<vmem>>, vector<1x1x128xf32>,
    return
  }
  func.func @transform_0(%arg0: i32) -> (i32, i32, i32) {
    %c0_i32 = arith.constant 0 : i32
    %c0_i32_0 = arith.constant 0 : i32
    %c0_i32_1 = arith.constant 0 : i32
    return %arg0, %c0_i32, %c0_i32_0 : i32, i32, i32
  }
  func.func @transform_1(%arg0: i32) -> (i32, i32) {
    %c0_i32 = arith.constant 0 : i32
    %c0_i32_0 = arith.constant 0 : i32
    %c0_i32_1 = arith.constant 0 : i32
    return %c0_i32, %c0_i32_0 : i32, i32
  }
  func.func @transform_2(%arg0: i32) -> (i32, i32) {
    %c0_i32 = arith.constant 0 : i32
    %c0_i32_0 = arith.constant 0 : i32
    %c0_i32_1 = arith.constant 0 : i32
    return %c0_i32, %c0_i32_0 : i32, i32
  }
  func.func @transform_3(%arg0: i32) -> (i32, i32) {
    %c0_i32 = arith.constant 0 : i32
    %c0_i32_0 = arith.constant 0 : i32
    %c0_i32_1 = arith.constant 0 : i32
    return %c0_i32, %c0_i32_0 : i32, i32
  }
  func.func @transform_4(%arg0: i32) -> (i32, i32) {
    %c0_i32 = arith.constant 0 : i32
    %c0_i32_0 = arith.constant 0 : i32
    %c0_i32_1 = arith.constant 0 : i32
    return %c0_i32, %c0_i32_0 : i32, i32
  }
  func.func @transform_5(%arg0: i32) -> (i32, i32) {
    %c0_i32 = arith.constant 0 : i32
    %c0_i32_0 = arith.constant 0 : i32
    %c0_i32_1 = arith.constant 0 : i32
    return %c0_i32, %c0_i32_0 : i32, i32
  }
  func.func @transform_6(%arg0: i32) -> (i32, i32) {
    %c0_i32 = arith.constant 0 : i32
    %c0_i32_0 = arith.constant 0 : i32
    %c0_i32_1 = arith.constant 0 : i32
    return %c0_i32, %c0_i32_0 : i32, i32
  }
  func.func @transform_7(%arg0: i32) -> (i32, i32) {
    %c0_i32 = arith.constant 0 : i32
    %c0_i32_0 = arith.constant 0 : i32
    %c0_i32_1 = arith.constant 0 : i32
    return %c0_i32, %c0_i32_0 : i32, i32
  }
  func.func @transform_8(%arg0: i32) -> (i32, i32) {
    %c0_i32 = arith.constant 0 : i32
    %c0_i32_0 = arith.constant 0 : i32
    %c0_i32_1 = arith.constant 0 : i32
    return %c0_i32, %c0_i32_0 : i32, i32
  }
  func.func @transform_9(%arg0: i32) -> (i32, i32) {
    %c0_i32 = arith.constant 0 : i32
    %c0_i32_0 = arith.constant 0 : i32
    %c0_i32_1 = arith.constant 0 : i32
    return %c0_i32, %c0_i32_0 : i32, i32
  }
  func.func @transform_10(%arg0: i32) -> (i32, i32) {
    %c0_i32 = arith.constant 0 : i32
    %c0_i32_0 = arith.constant 0 : i32
    %c0_i32_1 = arith.constant 0 : i32
    return %c0_i32, %c0_i32_0 : i32, i32
  }
  func.func @transform_11(%arg0: i32) -> (i32, i32, i32) {
    %c0_i32 = arith.constant 0 : i32
    %c0_i32_0 = arith.constant 0 : i32
    %c0_i32_1 = arith.constant 0 : i32
    return %arg0, %c0_i32, %c0_i32_0 : i32, i32, i32
  }
}

</mosaic_0001>

<llo_original>
// kernel: tpu_custom_call.1
$region0: #{tpu_custom_call.1}
  #allocation0 [shape = 'u32[]', space=smem, size = 0x4, offset = 0x4, fixed_abs, tag = 'smem constant byte address 0x4 - core index']
  #allocation1 [shape = 'u32[144,128]{1,0:T(1,128)}', space=vmem, size = 0x12000, scoped, tag = 'internal scratch']
  #allocation2 [shape = 'f32[1,1]{1,0:T(1,128)S(1)}', space=vmem, size = 0x200, scoped, tag = 'scoped memory for tpu_custom_call.1']
  %s0 = inlined_call_operand.vmem [shape: f32[1,1,128], index: 0, kind: input, shape index: {}]
  %s1 = inlined_call_operand.vmem [shape: f32[128,1], index: 1, kind: input, shape index: {}]
  %s2 = inlined_call_operand.vmem [shape: f32[128,1], index: 2, kind: input, shape index: {}]
  %s3 = inlined_call_operand.vmem [shape: f32[128,1], index: 3, kind: input, shape index: {}]
  %s4 = inlined_call_operand.vmem [shape: f32[128,1], index: 4, kind: input, shape index: {}]
  %s5 = inlined_call_operand.vmem [shape: f32[64,128], index: 5, kind: input, shape index: {}]
  %s6 = inlined_call_operand.vmem [shape: f32[64,1], index: 6, kind: input, shape index: {}]
  %s7 = inlined_call_operand.vmem [shape: f32[64,1], index: 7, kind: input, shape index: {}]
  %s8 = inlined_call_operand.vmem [shape: f32[64,1], index: 8, kind: input, shape index: {}]
  %s9 = inlined_call_operand.vmem [shape: f32[64,1], index: 9, kind: input, shape index: {}]
  %s10 = inlined_call_operand.<no memory space> [shape: f32[1,1], index: 10, kind: input, shape index: {}]
  %s11 = inlined_call_operand.hbm [shape: f32[1,1,128], index: 11, kind: output, shape index: {}]
  %s12 = sld [smem:[#allocation0]]
  $region54: #{tpu_custom_call.1} parent=0
    _
  %s14 = ssub.s32 1, %s12
  %s15 = scalar_select 0, %s14, %s12
  %v16 = vstv %s10
  %17 = vst [vmem:[#allocation2] sm:$0x1] %v16
  $region1: #{tpu_custom_call.1} parent=0
    #allocation3 [shape = 'u8[512]{0}', space=vmem, size = 0x400, scoped, tag = 'output window, operand 0, single buffered']
    #allocation4 [shape = 's32[1]{0}', space=sflag, size = 0x4, scoped, tag = 'scoped memory for tpu_custom_call.1']
    %18 = vsyncpa [#allocation4], 0
    // Predicated region
    $region2: #{tpu_custom_call.1} parent=1 // pred_check
      _
    $region3: #{tpu_custom_call.1} parent=1 // pred_check_branch
      %20 = sbr.rel (0) target = $region5
    $region4: #{tpu_custom_call.1} parent=1 // pred_region
      _
    $region5: #{tpu_custom_call.1} parent=1 // pred_fallthru
      _
    // Predicated region
    $region6: #{tpu_custom_call.1} parent=1 // pred_check
      _
    $region7: #{tpu_custom_call.1} parent=1 // pred_check_branch
      %22 = sbr.rel (0) target = $region9
    $region8: #{tpu_custom_call.1} parent=1 // pred_region
      _
    $region9: #{tpu_custom_call.1} parent=1 // pred_fallthru
      _
    // Predicated region
    $region10: #{tpu_custom_call.1} parent=1 // pred_check
      _
    $region11: #{tpu_custom_call.1} parent=1 // pred_check_branch
      %24 = sbr.rel (0) target = $region13
    $region12: #{tpu_custom_call.1} parent=1 // pred_region
      _
    $region13: #{tpu_custom_call.1} parent=1 // pred_fallthru
      _
    // Predicated region
    $region14: #{tpu_custom_call.1} parent=1 // pred_check
      _
    $region15: #{tpu_custom_call.1} parent=1 // pred_check_branch
      %26 = sbr.rel (0) target = $region17
    $region16: #{tpu_custom_call.1} parent=1 // pred_region
      _
    $region17: #{tpu_custom_call.1} parent=1 // pred_fallthru
      _
    // Predicated region
    $region18: #{tpu_custom_call.1} parent=1 // pred_check
      _
    $region19: #{tpu_custom_call.1} parent=1 // pred_check_branch
      %28 = sbr.rel (0) target = $region21
    $region20: #{tpu_custom_call.1} parent=1 // pred_region
      _
    $region21: #{tpu_custom_call.1} parent=1 // pred_fallthru
      _
    // Predicated region
    $region22: #{tpu_custom_call.1} parent=1 // pred_check
      _
    $region23: #{tpu_custom_call.1} parent=1 // pred_check_branch
      %30 = sbr.rel (0) target = $region25
    $region24: #{tpu_custom_call.1} parent=1 // pred_region
      _
    $region25: #{tpu_custom_call.1} parent=1 // pred_fallthru
      _
    // Predicated region
    $region26: #{tpu_custom_call.1} parent=1 // pred_check
      _
    $region27: #{tpu_custom_call.1} parent=1 // pred_check_branch
      %32 = sbr.rel (0) target = $region29
    $region28: #{tpu_custom_call.1} parent=1 // pred_region
      _
    $region29: #{tpu_custom_call.1} parent=1 // pred_fallthru
      _
    // Predicated region
    $region30: #{tpu_custom_call.1} parent=1 // pred_check
      _
    $region31: #{tpu_custom_call.1} parent=1 // pred_check_branch
      %34 = sbr.rel (0) target = $region33
    $region32: #{tpu_custom_call.1} parent=1 // pred_region
      _
    $region33: #{tpu_custom_call.1} parent=1 // pred_fallthru
      _
    // Predicated region
    $region34: #{tpu_custom_call.1} parent=1 // pred_check
      _
    $region35: #{tpu_custom_call.1} parent=1 // pred_check_branch
      %36 = sbr.rel (0) target = $region37
    $region36: #{tpu_custom_call.1} parent=1 // pred_region
      _
    $region37: #{tpu_custom_call.1} parent=1 // pred_fallthru
      _
    // Predicated region
    $region38: #{tpu_custom_call.1} parent=1 // pred_check
      _
    $region39: #{tpu_custom_call.1} parent=1 // pred_check_branch
      %38 = sbr.rel (0) target = $region41
    $region40: #{tpu_custom_call.1} parent=1 // pred_region
      _
    $region41: #{tpu_custom_call.1} parent=1 // pred_fallthru
      _
    // Predicated region
    $region42: #{tpu_custom_call.1} parent=1 // pred_check
      _
    $region43: #{tpu_custom_call.1} parent=1 // pred_check_branch
      %40 = sbr.rel (0) target = $region45
    $region44: #{tpu_custom_call.1} parent=1 // pred_region
      _
    $region45: #{tpu_custom_call.1} parent=1 // pred_fallthru
      _
    %v41 = vld [vmem:[%s0] sm:$0x1]
    %v42 = vld [vmem:[%s1] sm:$0xff]
    %v43 = vld [vmem:[%s1 + $0x8] sm:$0xff]
    %v44 = vld [vmem:[%s1 + $0x10] sm:$0xff]
    %v45 = vld [vmem:[%s1 + $0x18] sm:$0xff]
    %v46 = vld [vmem:[%s1 + $0x20] sm:$0xff]
    %v47 = vld [vmem:[%s1 + $0x28] sm:$0xff]
    %v48 = vld [vmem:[%s1 + $0x30] sm:$0xff]
    %v49 = vld [vmem:[%s1 + $0x38] sm:$0xff]
    %v50 = vld [vmem:[%s1 + $0x40] sm:$0xff]
    %v51 = vld [vmem:[%s1 + $0x48] sm:$0xff]
    %v52 = vld [vmem:[%s1 + $0x50] sm:$0xff]
    %v53 = vld [vmem:[%s1 + $0x58] sm:$0xff]
    %v54 = vld [vmem:[%s1 + $0x60] sm:$0xff]
    %v55 = vld [vmem:[%s1 + $0x68] sm:$0xff]
    %v56 = vld [vmem:[%s1 + $0x70] sm:$0xff]
    %v57 = vld [vmem:[%s1 + $0x78] sm:$0xff]
    %v59 = vlaneseq
    %v60 = vshrl.u32 %v59, 7
    %v61 = vsub.s32 0, %v60
    %v62 = vrot.slane %v41, %v61
    %65 = vset.pattern.permute.xlu0 0
    %66 = vperm.xlu0 %65, %v42
    %v67 = vpop.permute.xlu0 %66
    %70 = vset.pattern.permute.xlu0 0
    %71 = vperm.xlu0 %70, %v43
    %v72 = vpop.permute.xlu0 %71
    %75 = vset.pattern.permute.xlu0 0
    %76 = vperm.xlu0 %75, %v44
    %v77 = vpop.permute.xlu0 %76
    %80 = vset.pattern.permute.xlu0 0
    %81 = vperm.xlu0 %80, %v45
    %v82 = vpop.permute.xlu0 %81
    %85 = vset.pattern.permute.xlu0 0
    %86 = vperm.xlu0 %85, %v46
    %v87 = vpop.permute.xlu0 %86
    %90 = vset.pattern.permute.xlu0 0
    %91 = vperm.xlu0 %90, %v47
    %v92 = vpop.permute.xlu0 %91
    %95 = vset.pattern.permute.xlu0 0
    %96 = vperm.xlu0 %95, %v48
    %v97 = vpop.permute.xlu0 %96
    %100 = vset.pattern.permute.xlu0 0
    %101 = vperm.xlu0 %100, %v49
    %v102 = vpop.permute.xlu0 %101
    %105 = vset.pattern.permute.xlu0 0
    %106 = vperm.xlu0 %105, %v50
    %v107 = vpop.permute.xlu0 %106
    %110 = vset.pattern.permute.xlu0 0
    %111 = vperm.xlu0 %110, %v51
    %v112 = vpop.permute.xlu0 %111
    %115 = vset.pattern.permute.xlu0 0
    %116 = vperm.xlu0 %115, %v52
    %v117 = vpop.permute.xlu0 %116
    %120 = vset.pattern.permute.xlu0 0
    %121 = vperm.xlu0 %120, %v53
    %v122 = vpop.permute.xlu0 %121
    %125 = vset.pattern.permute.xlu0 0
    %126 = vperm.xlu0 %125, %v54
    %v127 = vpop.permute.xlu0 %126
    %130 = vset.pattern.permute.xlu0 0
    %131 = vperm.xlu0 %130, %v55
    %v132 = vpop.permute.xlu0 %131
    %135 = vset.pattern.permute.xlu0 0
    %136 = vperm.xlu0 %135, %v56
    %v137 = vpop.permute.xlu0 %136
    %140 = vset.pattern.permute.xlu0 0
    %141 = vperm.xlu0 %140, %v57
    %v142 = vpop.permute.xlu0 %141
    %v144 = vmul.f32 %v62, %v67
    %v145 = vmul.f32 %v62, %v72
    %v146 = vmul.f32 %v62, %v77
    %v147 = vmul.f32 %v62, %v82
    %v148 = vmul.f32 %v62, %v87
    %v149 = vmul.f32 %v62, %v92
    %v150 = vmul.f32 %v62, %v97
    %v151 = vmul.f32 %v62, %v102
    %v152 = vmul.f32 %v62, %v107
    %v153 = vmul.f32 %v62, %v112
    %v154 = vmul.f32 %v62, %v117
    %v155 = vmul.f32 %v62, %v122
    %v156 = vmul.f32 %v62, %v127
    %v157 = vmul.f32 %v62, %v132
    %v158 = vmul.f32 %v62, %v137
    %v159 = vmul.f32 %v62, %v142
    %v160 = vld [vmem:[%s2] sm:$0xff]
    %v161 = vld [vmem:[%s2 + $0x8] sm:$0xff]
    %v162 = vld [vmem:[%s2 + $0x10] sm:$0xff]
    %v163 = vld [vmem:[%s2 + $0x18] sm:$0xff]
    %v164 = vld [vmem:[%s2 + $0x20] sm:$0xff]
    %v165 = vld [vmem:[%s2 + $0x28] sm:$0xff]
    %v166 = vld [vmem:[%s2 + $0x30] sm:$0xff]
    %v167 = vld [vmem:[%s2 + $0x38] sm:$0xff]
    %v168 = vld [vmem:[%s2 + $0x40] sm:$0xff]
    %v169 = vld [vmem:[%s2 + $0x48] sm:$0xff]
    %v170 = vld [vmem:[%s2 + $0x50] sm:$0xff]
    %v171 = vld [vmem:[%s2 + $0x58] sm:$0xff]
    %v172 = vld [vmem:[%s2 + $0x60] sm:$0xff]
    %v173 = vld [vmem:[%s2 + $0x68] sm:$0xff]
    %v174 = vld [vmem:[%s2 + $0x70] sm:$0xff]
    %v175 = vld [vmem:[%s2 + $0x78] sm:$0xff]
    %177 = vset.pattern.permute.xlu0 0
    %178 = vperm.xlu0 %177, %v160
    %v179 = vpop.permute.xlu0 %178
    %182 = vset.pattern.permute.xlu0 0
    %183 = vperm.xlu0 %182, %v161
    %v184 = vpop.permute.xlu0 %183
    %187 = vset.pattern.permute.xlu0 0
    %188 = vperm.xlu0 %187, %v162
    %v189 = vpop.permute.xlu0 %188
    %192 = vset.pattern.permute.xlu0 0
    %193 = vperm.xlu0 %192, %v163
    %v194 = vpop.permute.xlu0 %193
    %197 = vset.pattern.permute.xlu0 0
    %198 = vperm.xlu0 %197, %v164
    %v199 = vpop.permute.xlu0 %198
    %202 = vset.pattern.permute.xlu0 0
    %203 = vperm.xlu0 %202, %v165
    %v204 = vpop.permute.xlu0 %203
    %207 = vset.pattern.permute.xlu0 0
    %208 = vperm.xlu0 %207, %v166
    %v209 = vpop.permute.xlu0 %208
    %212 = vset.pattern.permute.xlu0 0
    %213 = vperm.xlu0 %212, %v167
    %v214 = vpop.permute.xlu0 %213
    %217 = vset.pattern.permute.xlu0 0
    %218 = vperm.xlu0 %217, %v168
    %v219 = vpop.permute.xlu0 %218
    %222 = vset.pattern.permute.xlu0 0
    %223 = vperm.xlu0 %222, %v169
    %v224 = vpop.permute.xlu0 %223
    %227 = vset.pattern.permute.xlu0 0
    %228 = vperm.xlu0 %227, %v170
    %v229 = vpop.permute.xlu0 %228
    %232 = vset.pattern.permute.xlu0 0
    %233 = vperm.xlu0 %232, %v171
    %v234 = vpop.permute.xlu0 %233
    %237 = vset.pattern.permute.xlu0 0
    %238 = vperm.xlu0 %237, %v172
    %v239 = vpop.permute.xlu0 %238
    %242 = vset.pattern.permute.xlu0 0
    %243 = vperm.xlu0 %242, %v173
    %v244 = vpop.permute.xlu0 %243
    %247 = vset.pattern.permute.xlu0 0
    %248 = vperm.xlu0 %247, %v174
    %v249 = vpop.permute.xlu0 %248
    %252 = vset.pattern.permute.xlu0 0
    %253 = vperm.xlu0 %252, %v175
    %v254 = vpop.permute.xlu0 %253
    %v256 = vadd.f32 %v144, %v179
    %v257 = vadd.f32 %v145, %v184
    %v258 = vadd.f32 %v146, %v189
    %v259 = vadd.f32 %v147, %v194
    %v260 = vadd.f32 %v148, %v199
    %v261 = vadd.f32 %v149, %v204
    %v262 = vadd.f32 %v150, %v209
    %v263 = vadd.f32 %v151, %v214
    %v264 = vadd.f32 %v152, %v219
    %v265 = vadd.f32 %v153, %v224
    %v266 = vadd.f32 %v154, %v229
    %v267 = vadd.f32 %v155, %v234
    %v268 = vadd.f32 %v156, %v239
    %v269 = vadd.f32 %v157, %v244
    %v270 = vadd.f32 %v158, %v249
    %v271 = vadd.f32 %v159, %v254
    %v272 = vld [vmem:[%s3] sm:$0xff]
    %v273 = vld [vmem:[%s3 + $0x8] sm:$0xff]
    %v274 = vld [vmem:[%s3 + $0x10] sm:$0xff]
    %v275 = vld [vmem:[%s3 + $0x18] sm:$0xff]
    %v276 = vld [vmem:[%s3 + $0x20] sm:$0xff]
    %v277 = vld [vmem:[%s3 + $0x28] sm:$0xff]
    %v278 = vld [vmem:[%s3 + $0x30] sm:$0xff]
    %v279 = vld [vmem:[%s3 + $0x38] sm:$0xff]
    %v280 = vld [vmem:[%s3 + $0x40] sm:$0xff]
    %v281 = vld [vmem:[%s3 + $0x48] sm:$0xff]
    %v282 = vld [vmem:[%s3 + $0x50] sm:$0xff]
    %v283 = vld [vmem:[%s3 + $0x58] sm:$0xff]
    %v284 = vld [vmem:[%s3 + $0x60] sm:$0xff]
    %v285 = vld [vmem:[%s3 + $0x68] sm:$0xff]
    %v286 = vld [vmem:[%s3 + $0x70] sm:$0xff]
    %v287 = vld [vmem:[%s3 + $0x78] sm:$0xff]
    %v288 = vld [vmem:[%s4] sm:$0xff]
    %v289 = vld [vmem:[%s4 + $0x8] sm:$0xff]
    %v290 = vld [vmem:[%s4 + $0x10] sm:$0xff]
    %v291 = vld [vmem:[%s4 + $0x18] sm:$0xff]
    %v292 = vld [vmem:[%s4 + $0x20] sm:$0xff]
    %v293 = vld [vmem:[%s4 + $0x28] sm:$0xff]
    %v294 = vld [vmem:[%s4 + $0x30] sm:$0xff]
    %v295 = vld [vmem:[%s4 + $0x38] sm:$0xff]
    %v296 = vld [vmem:[%s4 + $0x40] sm:$0xff]
    %v297 = vld [vmem:[%s4 + $0x48] sm:$0xff]
    %v298 = vld [vmem:[%s4 + $0x50] sm:$0xff]
    %v299 = vld [vmem:[%s4 + $0x58] sm:$0xff]
    %v300 = vld [vmem:[%s4 + $0x60] sm:$0xff]
    %v301 = vld [vmem:[%s4 + $0x68] sm:$0xff]
    %v302 = vld [vmem:[%s4 + $0x70] sm:$0xff]
    %v303 = vld [vmem:[%s4 + $0x78] sm:$0xff]
    %v304 = vadd.f32 %v256, %v257
    %v305 = vadd.f32 %v304, %v258
    %v306 = vadd.f32 %v305, %v259
    %v307 = vadd.f32 %v306, %v260
    %v308 = vadd.f32 %v307, %v261
    %v309 = vadd.f32 %v308, %v262
    %v310 = vadd.f32 %v309, %v263
    %v311 = vadd.f32 %v310, %v264
    %v312 = vadd.f32 %v311, %v265
    %v313 = vadd.f32 %v312, %v266
    %v314 = vadd.f32 %v313, %v267
    %v315 = vadd.f32 %v314, %v268
    %v316 = vadd.f32 %v315, %v269
    %v317 = vadd.f32 %v316, %v270
    %v318 = vadd.f32 %v317, %v271
    %v319 = vrot.slane %v318, 4
    %v320 = vadd.f32 %v318, %v319
    %v321 = vrot.slane %v320, 2
    %v322 = vadd.f32 %v320, %v321
    %v323 = vrot.slane %v322, 1
    %v324 = vadd.f32 %v322, %v323
    %v325 = vmul.f32 %v256, %v256
    %v326 = vmul.f32 %v257, %v257
    %v327 = vmul.f32 %v258, %v258
    %v328 = vmul.f32 %v259, %v259
    %v329 = vmul.f32 %v260, %v260
    %v330 = vmul.f32 %v261, %v261
    %v331 = vmul.f32 %v262, %v262
    %v332 = vmul.f32 %v263, %v263
    %v333 = vmul.f32 %v264, %v264
    %v334 = vmul.f32 %v265, %v265
    %v335 = vmul.f32 %v266, %v266
    %v336 = vmul.f32 %v267, %v267
    %v337 = vmul.f32 %v268, %v268
    %v338 = vmul.f32 %v269, %v269
    %v339 = vmul.f32 %v270, %v270
    %v340 = vmul.f32 %v271, %v271
    %v341 = vadd.f32 %v325, %v326
    %v342 = vadd.f32 %v341, %v327
    %v343 = vadd.f32 %v342, %v328
    %v344 = vadd.f32 %v343, %v329
    %v345 = vadd.f32 %v344, %v330
    %v346 = vadd.f32 %v345, %v331
    %v347 = vadd.f32 %v346, %v332
    %v348 = vadd.f32 %v347, %v333
    %v349 = vadd.f32 %v348, %v334
    %v350 = vadd.f32 %v349, %v335
    %v351 = vadd.f32 %v350, %v336
    %v352 = vadd.f32 %v351, %v337
    %v353 = vadd.f32 %v352, %v338
    %v354 = vadd.f32 %v353, %v339
    %v355 = vadd.f32 %v354, %v340
    %v356 = vrot.slane %v355, 4
    %v357 = vadd.f32 %v355, %v356
    %v358 = vrot.slane %v357, 2
    %v359 = vadd.f32 %v357, %v358
    %v360 = vrot.slane %v359, 1
    %v361 = vadd.f32 %v359, %v360
    %v362 = vmul.f32 %v324, 0.0078125
    %v363 = vmul.f32 %v361, 0.0078125
    %v364 = vmul.f32 %v362, %v362
    %v365 = vsub.f32 %v363, %v364
    %v366 = vmax.f32 %v365, 0.0
    %v367 = vsub.f32 %v256, %v362
    %v368 = vsub.f32 %v257, %v362
    %v369 = vsub.f32 %v258, %v362
    %v370 = vsub.f32 %v259, %v362
    %v371 = vsub.f32 %v260, %v362
    %v372 = vsub.f32 %v261, %v362
    %v373 = vsub.f32 %v262, %v362
    %v374 = vsub.f32 %v263, %v362
    %v375 = vsub.f32 %v264, %v362
    %v376 = vsub.f32 %v265, %v362
    %v377 = vsub.f32 %v266, %v362
    %v378 = vsub.f32 %v267, %v362
    %v379 = vsub.f32 %v268, %v362
    %v380 = vsub.f32 %v269, %v362
    %v381 = vsub.f32 %v270, %v362
    %v382 = vsub.f32 %v271, %v362
    %v383 = vadd.f32 %v366, 1e-05
    %v384 = vrsqrt.pop %v383
    %v385 = vmul.f32 %v367, %v384
    %v386 = vmul.f32 %v368, %v384
    %v387 = vmul.f32 %v369, %v384
    %v388 = vmul.f32 %v370, %v384
    %v389 = vmul.f32 %v371, %v384
    %v390 = vmul.f32 %v372, %v384
    %v391 = vmul.f32 %v373, %v384
    %v392 = vmul.f32 %v374, %v384
    %v393 = vmul.f32 %v375, %v384
    %v394 = vmul.f32 %v376, %v384
    %v395 = vmul.f32 %v377, %v384
    %v396 = vmul.f32 %v378, %v384
    %v397 = vmul.f32 %v379, %v384
    %v398 = vmul.f32 %v380, %v384
    %v399 = vmul.f32 %v381, %v384
    %v400 = vmul.f32 %v382, %v384
    %402 = vset.pattern.permute.xlu0 0
    %403 = vperm.xlu0 %402, %v272
    %v404 = vpop.permute.xlu0 %403
    %407 = vset.pattern.permute.xlu0 0
    %408 = vperm.xlu0 %407, %v273
    %v409 = vpop.permute.xlu0 %408
    %412 = vset.pattern.permute.xlu0 0
    %413 = vperm.xlu0 %412, %v274
    %v414 = vpop.permute.xlu0 %413
    %417 = vset.pattern.permute.xlu0 0
    %418 = vperm.xlu0 %417, %v275
    %v419 = vpop.permute.xlu0 %418
    %422 = vset.pattern.permute.xlu0 0
    %423 = vperm.xlu0 %422, %v276
    %v424 = vpop.permute.xlu0 %423
    %427 = vset.pattern.permute.xlu0 0
    %428 = vperm.xlu0 %427, %v277
    %v429 = vpop.permute.xlu0 %428
    %432 = vset.pattern.permute.xlu0 0
    %433 = vperm.xlu0 %432, %v278
    %v434 = vpop.permute.xlu0 %433
    %437 = vset.pattern.permute.xlu0 0
    %438 = vperm.xlu0 %437, %v279
    %v439 = vpop.permute.xlu0 %438
    %442 = vset.pattern.permute.xlu0 0
    %443 = vperm.xlu0 %442, %v280
    %v444 = vpop.permute.xlu0 %443
    %447 = vset.pattern.permute.xlu0 0
    %448 = vperm.xlu0 %447, %v281
    %v449 = vpop.permute.xlu0 %448
    %452 = vset.pattern.permute.xlu0 0
    %453 = vperm.xlu0 %452, %v282
    %v454 = vpop.permute.xlu0 %453
    %457 = vset.pattern.permute.xlu0 0
    %458 = vperm.xlu0 %457, %v283
    %v459 = vpop.permute.xlu0 %458
    %462 = vset.pattern.permute.xlu0 0
    %463 = vperm.xlu0 %462, %v284
    %v464 = vpop.permute.xlu0 %463
    %467 = vset.pattern.permute.xlu0 0
    %468 = vperm.xlu0 %467, %v285
    %v469 = vpop.permute.xlu0 %468
    %472 = vset.pattern.permute.xlu0 0
    %473 = vperm.xlu0 %472, %v286
    %v474 = vpop.permute.xlu0 %473
    %477 = vset.pattern.permute.xlu0 0
    %478 = vperm.xlu0 %477, %v287
    %v479 = vpop.permute.xlu0 %478
    %v481 = vmul.f32 %v385, %v404
    %v482 = vmul.f32 %v386, %v409
    %v483 = vmul.f32 %v387, %v414
    %v484 = vmul.f32 %v388, %v419
    %v485 = vmul.f32 %v389, %v424
    %v486 = vmul.f32 %v390, %v429
    %v487 = vmul.f32 %v391, %v434
    %v488 = vmul.f32 %v392, %v439
    %v489 = vmul.f32 %v393, %v444
    %v490 = vmul.f32 %v394, %v449
    %v491 = vmul.f32 %v395, %v454
    %v492 = vmul.f32 %v396, %v459
    %v493 = vmul.f32 %v397, %v464
    %v494 = vmul.f32 %v398, %v469
    %v495 = vmul.f32 %v399, %v474
    %v496 = vmul.f32 %v400, %v479
    %498 = vset.pattern.permute.xlu0 0
    %499 = vperm.xlu0 %498, %v288
    %v500 = vpop.permute.xlu0 %499
    %503 = vset.pattern.permute.xlu0 0
    %504 = vperm.xlu0 %503, %v289
    %v505 = vpop.permute.xlu0 %504
    %508 = vset.pattern.permute.xlu0 0
    %509 = vperm.xlu0 %508, %v290
    %v510 = vpop.permute.xlu0 %509
    %513 = vset.pattern.permute.xlu0 0
    %514 = vperm.xlu0 %513, %v291
    %v515 = vpop.permute.xlu0 %514
    %518 = vset.pattern.permute.xlu0 0
    %519 = vperm.xlu0 %518, %v292
    %v520 = vpop.permute.xlu0 %519
    %523 = vset.pattern.permute.xlu0 0
    %524 = vperm.xlu0 %523, %v293
    %v525 = vpop.permute.xlu0 %524
    %528 = vset.pattern.permute.xlu0 0
    %529 = vperm.xlu0 %528, %v294
    %v530 = vpop.permute.xlu0 %529
    %533 = vset.pattern.permute.xlu0 0
    %534 = vperm.xlu0 %533, %v295
    %v535 = vpop.permute.xlu0 %534
    %538 = vset.pattern.permute.xlu0 0
    %539 = vperm.xlu0 %538, %v296
    %v540 = vpop.permute.xlu0 %539
    %543 = vset.pattern.permute.xlu0 0
    %544 = vperm.xlu0 %543, %v297
    %v545 = vpop.permute.xlu0 %544
    %548 = vset.pattern.permute.xlu0 0
    %549 = vperm.xlu0 %548, %v298
    %v550 = vpop.permute.xlu0 %549
    %553 = vset.pattern.permute.xlu0 0
    %554 = vperm.xlu0 %553, %v299
    %v555 = vpop.permute.xlu0 %554
    %558 = vset.pattern.permute.xlu0 0
    %559 = vperm.xlu0 %558, %v300
    %v560 = vpop.permute.xlu0 %559
    %563 = vset.pattern.permute.xlu0 0
    %564 = vperm.xlu0 %563, %v301
    %v565 = vpop.permute.xlu0 %564
    %568 = vset.pattern.permute.xlu0 0
    %569 = vperm.xlu0 %568, %v302
    %v570 = vpop.permute.xlu0 %569
    %573 = vset.pattern.permute.xlu0 0
    %574 = vperm.xlu0 %573, %v303
    %v575 = vpop.permute.xlu0 %574
    %v577 = vadd.f32 %v481, %v500
    %v578 = vadd.f32 %v482, %v505
    %v579 = vadd.f32 %v483, %v510
    %v580 = vadd.f32 %v484, %v515
    %v581 = vadd.f32 %v485, %v520
    %v582 = vadd.f32 %v486, %v525
    %v583 = vadd.f32 %v487, %v530
    %v584 = vadd.f32 %v488, %v535
    %v585 = vadd.f32 %v489, %v540
    %v586 = vadd.f32 %v490, %v545
    %v587 = vadd.f32 %v491, %v550
    %v588 = vadd.f32 %v492, %v555
    %v589 = vadd.f32 %v493, %v560
    %v590 = vadd.f32 %v494, %v565
    %v591 = vadd.f32 %v495, %v570
    %v592 = vadd.f32 %v496, %v575
    %vm593 = vcmp.gt.f32.partialorder %v577, 0.0
    %vm594 = vcmp.gt.f32.partialorder %v578, 0.0
    %vm595 = vcmp.gt.f32.partialorder %v579, 0.0
    %vm596 = vcmp.gt.f32.partialorder %v580, 0.0
    %vm597 = vcmp.gt.f32.partialorder %v581, 0.0
    %vm598 = vcmp.gt.f32.partialorder %v582, 0.0
    %vm599 = vcmp.gt.f32.partialorder %v583, 0.0
    %vm600 = vcmp.gt.f32.partialorder %v584, 0.0
    %vm601 = vcmp.gt.f32.partialorder %v585, 0.0
    %vm602 = vcmp.gt.f32.partialorder %v586, 0.0
    %vm603 = vcmp.gt.f32.partialorder %v587, 0.0
    %vm604 = vcmp.gt.f32.partialorder %v588, 0.0
    %vm605 = vcmp.gt.f32.partialorder %v589, 0.0
    %vm606 = vcmp.gt.f32.partialorder %v590, 0.0
    %vm607 = vcmp.gt.f32.partialorder %v591, 0.0
    %vm608 = vcmp.gt.f32.partialorder %v592, 0.0
    %v609 = vmin.f32 %v577, 0.0
    %v610 = vmin.f32 %v578, 0.0
    %v611 = vmin.f32 %v579, 0.0
    %v612 = vmin.f32 %v580, 0.0
    %v613 = vmin.f32 %v581, 0.0
    %v614 = vmin.f32 %v582, 0.0
    %v615 = vmin.f32 %v583, 0.0
    %v616 = vmin.f32 %v584, 0.0
    %v617 = vmin.f32 %v585, 0.0
    %v618 = vmin.f32 %v586, 0.0
    %v619 = vmin.f32 %v587, 0.0
    %v620 = vmin.f32 %v588, 0.0
    %v621 = vmin.f32 %v589, 0.0
    %v622 = vmin.f32 %v590, 0.0
    %v623 = vmin.f32 %v591, 0.0
    %v624 = vmin.f32 %v592, 0.0
    %v625 = vmul.f32 %v609, 1.442695
    %v626 = vpow.pop %v625
    %v627 = vmul.f32 %v610, 1.442695
    %v628 = vpow.pop %v627
    %v629 = vmul.f32 %v611, 1.442695
    %v630 = vpow.pop %v629
    %v631 = vmul.f32 %v612, 1.442695
    %v632 = vpow.pop %v631
    %v633 = vmul.f32 %v613, 1.442695
    %v634 = vpow.pop %v633
    %v635 = vmul.f32 %v614, 1.442695
    %v636 = vpow.pop %v635
    %v637 = vmul.f32 %v615, 1.442695
    %v638 = vpow.pop %v637
    %v639 = vmul.f32 %v616, 1.442695
    %v640 = vpow.pop %v639
    %v641 = vmul.f32 %v617, 1.442695
    %v642 = vpow.pop %v641
    %v643 = vmul.f32 %v618, 1.442695
    %v644 = vpow.pop %v643
    %v645 = vmul.f32 %v619, 1.442695
    %v646 = vpow.pop %v645
    %v647 = vmul.f32 %v620, 1.442695
    %v648 = vpow.pop %v647
    %v649 = vmul.f32 %v621, 1.442695
    %v650 = vpow.pop %v649
    %v651 = vmul.f32 %v622, 1.442695
    %v652 = vpow.pop %v651
    %v653 = vmul.f32 %v623, 1.442695
    %v654 = vpow.pop %v653
    %v655 = vmul.f32 %v624, 1.442695
    %v656 = vpow.pop %v655
    %v657 = vsub.f32 %v626, 1.0
    %v658 = vsub.f32 %v628, 1.0
    %v659 = vsub.f32 %v630, 1.0
    %v660 = vsub.f32 %v632, 1.0
    %v661 = vsub.f32 %v634, 1.0
    %v662 = vsub.f32 %v636, 1.0
    %v663 = vsub.f32 %v638, 1.0
    %v664 = vsub.f32 %v640, 1.0
    %v665 = vsub.f32 %v642, 1.0
    %v666 = vsub.f32 %v644, 1.0
    %v667 = vsub.f32 %v646, 1.0
    %v668 = vsub.f32 %v648, 1.0
    %v669 = vsub.f32 %v650, 1.0
    %v670 = vsub.f32 %v652, 1.0
    %v671 = vsub.f32 %v654, 1.0
    %v672 = vsub.f32 %v656, 1.0
    %v673 = vsel %vm593, %v577, %v657
    %v674 = vsel %vm594, %v578, %v658
    %v675 = vsel %vm595, %v579, %v659
    %v676 = vsel %vm596, %v580, %v660
    %v677 = vsel %vm597, %v581, %v661
    %v678 = vsel %vm598, %v582, %v662
    %v679 = vsel %vm599, %v583, %v663
    %v680 = vsel %vm600, %v584, %v664
    %v681 = vsel %vm601, %v585, %v665
    %v682 = vsel %vm602, %v586, %v666
    %v683 = vsel %vm603, %v587, %v667
    %v684 = vsel %vm604, %v588, %v668
    %v685 = vsel %vm605, %v589, %v669
    %v686 = vsel %vm606, %v590, %v670
    %v687 = vsel %vm607, %v591, %v671
    %v688 = vsel %vm608, %v592, %v672
    %v689 = vld [vmem:[%s5] sm:$0xff]
    %v690 = vld [vmem:[%s5 + $0x8] sm:$0xff]
    %v691 = vld [vmem:[%s5 + $0x10] sm:$0xff]
    %v692 = vld [vmem:[%s5 + $0x18] sm:$0xff]
    %v693 = vld [vmem:[%s5 + $0x20] sm:$0xff]
    %v694 = vld [vmem:[%s5 + $0x28] sm:$0xff]
    %v695 = vld [vmem:[%s5 + $0x30] sm:$0xff]
    %v696 = vld [vmem:[%s5 + $0x38] sm:$0xff]
    %v697 = vld [vmem:[%s6] sm:$0xff]
    %v698 = vld [vmem:[%s6 + $0x8] sm:$0xff]
    %v699 = vld [vmem:[%s6 + $0x10] sm:$0xff]
    %v700 = vld [vmem:[%s6 + $0x18] sm:$0xff]
    %v701 = vld [vmem:[%s6 + $0x20] sm:$0xff]
    %v702 = vld [vmem:[%s6 + $0x28] sm:$0xff]
    %v703 = vld [vmem:[%s6 + $0x30] sm:$0xff]
    %v704 = vld [vmem:[%s6 + $0x38] sm:$0xff]
    %706 = vset.pattern.permute.xlu0 0
    %707 = vperm.xlu0 %706, %v697
    %v708 = vpop.permute.xlu0 %707
    %711 = vset.pattern.permute.xlu0 0
    %712 = vperm.xlu0 %711, %v698
    %v713 = vpop.permute.xlu0 %712
    %716 = vset.pattern.permute.xlu0 0
    %717 = vperm.xlu0 %716, %v699
    %v718 = vpop.permute.xlu0 %717
    %721 = vset.pattern.permute.xlu0 0
    %722 = vperm.xlu0 %721, %v700
    %v723 = vpop.permute.xlu0 %722
    %726 = vset.pattern.permute.xlu0 0
    %727 = vperm.xlu0 %726, %v701
    %v728 = vpop.permute.xlu0 %727
    %731 = vset.pattern.permute.xlu0 0
    %732 = vperm.xlu0 %731, %v702
    %v733 = vpop.permute.xlu0 %732
    %736 = vset.pattern.permute.xlu0 0
    %737 = vperm.xlu0 %736, %v703
    %v738 = vpop.permute.xlu0 %737
    %741 = vset.pattern.permute.xlu0 0
    %742 = vperm.xlu0 %741, %v704
    %v743 = vpop.permute.xlu0 %742
    %745 = vmatprep.subr.mxu0 0.0
    %746 = vmatpush1.msra.mxu0 %v673
    %747 = vmatprep.subr.mxu0 0.0
    %748 = vmatpush1.msra.mxu0 %v674
    %749 = vmatprep.subr.mxu0 0.0
    %750 = vmatpush1.msra.mxu0 %v675
    %751 = vmatprep.subr.mxu0 0.0
    %752 = vmatpush1.msra.mxu0 %v676
    %753 = vmatprep.subr.mxu0 0.0
    %754 = vmatpush1.msra.mxu0 %v677
    %755 = vmatprep.subr.mxu0 0.0
    %756 = vmatpush1.msra.mxu0 %v678
    %757 = vmatprep.subr.mxu0 0.0
    %758 = vmatpush1.msra.mxu0 %v679
    %759 = vmatprep.subr.mxu0 0.0
    %760 = vmatpush1.msra.mxu0 %v680
    %761 = vmatprep.subr.mxu0 0.0
    %762 = vmatpush1.msra.mxu0 %v681
    %763 = vmatprep.subr.mxu0 0.0
    %764 = vmatpush1.msra.mxu0 %v682
    %765 = vmatprep.subr.mxu0 0.0
    %766 = vmatpush1.msra.mxu0 %v683
    %767 = vmatprep.subr.mxu0 0.0
    %768 = vmatpush1.msra.mxu0 %v684
    %769 = vmatprep.subr.mxu0 0.0
    %770 = vmatpush1.msra.mxu0 %v685
    %771 = vmatprep.subr.mxu0 0.0
    %772 = vmatpush1.msra.mxu0 %v686
    %773 = vmatprep.subr.mxu0 0.0
    %774 = vmatpush1.msra.mxu0 %v687
    %775 = vmatprep.subr.mxu0 0.0
    %776 = vmatpush1.msra.mxu0 %v688
    %777 = vmatprep.subr.mxu0 0.0
    %778 = vmatpush1.msra.mxu0 0.0
    %779 = vmatprep.subr.mxu0 0.0
    %780 = vmatpush1.msra.mxu0 0.0
    %781 = vmatprep.subr.mxu0 0.0
    %782 = vmatpush1.msra.mxu0 0.0
    %783 = vmatprep.subr.mxu0 0.0
    %784 = vmatpush1.msra.mxu0 0.0
    %785 = vmatprep.subr.mxu0 0.0
    %786 = vmatpush1.msra.mxu0 0.0
    %787 = vmatprep.subr.mxu0 0.0
    %788 = vmatpush1.msra.mxu0 0.0
    %789 = vmatprep.subr.mxu0 0.0
    %790 = vmatpush1.msra.mxu0 0.0
    %791 = vmatprep.subr.mxu0 0.0
    %792 = vmatpush1.msra.mxu0 0.0
    %793 = vmatprep.subr.mxu0 0.0
    %794 = vmatpush1.msra.mxu0 0.0
    %795 = vmatprep.subr.mxu0 0.0
    %796 = vmatpush1.msra.mxu0 0.0
    %797 = vmatprep.subr.mxu0 0.0
    %798 = vmatpush1.msra.mxu0 0.0
    %799 = vmatprep.subr.mxu0 0.0
    %800 = vmatpush1.msra.mxu0 0.0
    %801 = vmatprep.subr.mxu0 0.0
    %802 = vmatpush1.msra.mxu0 0.0
    %803 = vmatprep.subr.mxu0 0.0
    %804 = vmatpush1.msra.mxu0 0.0
    %805 = vmatprep.subr.mxu0 0.0
    %806 = vmatpush1.msra.mxu0 0.0
    %807 = vmatprep.subr.mxu0 0.0
    %808 = vmatpush1.msra.mxu0 0.0
    %809 = vmatprep.mubr.f32.mxu0 0.0
    %810 = vmatmul.mubr.f32.gmra.mrb[0].mxu0 %v689
    %v811 = vpop.f32.mrb[0].mxu0
    %v812 = vadd.f32 %v708, %v811
    %v813 = vpop.f32.mrb[0].mxu0
    %814 = vmatprep.mubr.f32.mxu0 0.0
    %815 = vmatmul.mubr.f32.gmra.mrb[0].mxu0 %v690
    %v816 = vpop.f32.mrb[0].mxu0
    %v817 = vadd.f32 %v713, %v816
    %v818 = vpop.f32.mrb[0].mxu0
    %819 = vmatprep.mubr.f32.mxu0 0.0
    %820 = vmatmul.mubr.f32.gmra.mrb[0].mxu0 %v691
    %v821 = vpop.f32.mrb[0].mxu0
    %v822 = vadd.f32 %v718, %v821
    %v823 = vpop.f32.mrb[0].mxu0
    %824 = vmatprep.mubr.f32.mxu0 0.0
    %825 = vmatmul.mubr.f32.gmra.mrb[0].mxu0 %v692
    %v826 = vpop.f32.mrb[0].mxu0
    %v827 = vadd.f32 %v723, %v826
    %v828 = vpop.f32.mrb[0].mxu0
    %829 = vmatprep.mubr.f32.mxu0 0.0
    %830 = vmatmul.mubr.f32.gmra.mrb[0].mxu0 %v693
    %v831 = vpop.f32.mrb[0].mxu0
    %v832 = vadd.f32 %v728, %v831
    %v833 = vpop.f32.mrb[0].mxu0
    %834 = vmatprep.mubr.f32.mxu0 0.0
    %835 = vmatmul.mubr.f32.gmra.mrb[0].mxu0 %v694
    %v836 = vpop.f32.mrb[0].mxu0
    %v837 = vadd.f32 %v733, %v836
    %v838 = vpop.f32.mrb[0].mxu0
    %839 = vmatprep.mubr.f32.mxu0 0.0
    %840 = vmatmul.mubr.f32.gmra.mrb[0].mxu0 %v695
    %v841 = vpop.f32.mrb[0].mxu0
    %v842 = vadd.f32 %v738, %v841
    %v843 = vpop.f32.mrb[0].mxu0
    %844 = vmatprep.mubr.f32.mxu0 0.0
    %845 = vmatmul.mubr.f32.gmra.mrb[0].mxu0 %v696
    %v846 = vpop.f32.mrb[0].mxu0
    %v847 = vadd.f32 %v743, %v846
    %v848 = vpop.f32.mrb[0].mxu0
    %849 = vdwg.mxu0
    %v850 = vld [vmem:[%s7] sm:$0xff]
    %v851 = vld [vmem:[%s7 + $0x8] sm:$0xff]
    %v852 = vld [vmem:[%s7 + $0x10] sm:$0xff]
    %v853 = vld [vmem:[%s7 + $0x18] sm:$0xff]
    %v854 = vld [vmem:[%s7 + $0x20] sm:$0xff]
    %v855 = vld [vmem:[%s7 + $0x28] sm:$0xff]
    %v856 = vld [vmem:[%s7 + $0x30] sm:$0xff]
    %v857 = vld [vmem:[%s7 + $0x38] sm:$0xff]
    %v858 = vld [vmem:[%s8] sm:$0xff]
    %v859 = vld [vmem:[%s8 + $0x8] sm:$0xff]
    %v860 = vld [vmem:[%s8 + $0x10] sm:$0xff]
    %v861 = vld [vmem:[%s8 + $0x18] sm:$0xff]
    %v862 = vld [vmem:[%s8 + $0x20] sm:$0xff]
    %v863 = vld [vmem:[%s8 + $0x28] sm:$0xff]
    %v864 = vld [vmem:[%s8 + $0x30] sm:$0xff]
    %v865 = vld [vmem:[%s8 + $0x38] sm:$0xff]
    %v866 = vadd.f32 %v812, %v817
    %v867 = vadd.f32 %v866, %v822
    %v868 = vadd.f32 %v867, %v827
    %v869 = vadd.f32 %v868, %v832
    %v870 = vadd.f32 %v869, %v837
    %v871 = vadd.f32 %v870, %v842
    %v872 = vadd.f32 %v871, %v847
    %v873 = vrot.slane %v872, 4
    %v874 = vadd.f32 %v872, %v873
    %v875 = vrot.slane %v874, 2
    %v876 = vadd.f32 %v874, %v875
    %v877 = vrot.slane %v876, 1
    %v878 = vadd.f32 %v876, %v877
    %v879 = vmul.f32 %v812, %v812
    %v880 = vmul.f32 %v817, %v817
    %v881 = vmul.f32 %v822, %v822
    %v882 = vmul.f32 %v827, %v827
    %v883 = vmul.f32 %v832, %v832
    %v884 = vmul.f32 %v837, %v837
    %v885 = vmul.f32 %v842, %v842
    %v886 = vmul.f32 %v847, %v847
    %v887 = vadd.f32 %v879, %v880
    %v888 = vadd.f32 %v887, %v881
    %v889 = vadd.f32 %v888, %v882
    %v890 = vadd.f32 %v889, %v883
    %v891 = vadd.f32 %v890, %v884
    %v892 = vadd.f32 %v891, %v885
    %v893 = vadd.f32 %v892, %v886
    %v894 = vrot.slane %v893, 4
    %v895 = vadd.f32 %v893, %v894
    %v896 = vrot.slane %v895, 2
    %v897 = vadd.f32 %v895, %v896
    %v898 = vrot.slane %v897, 1
    %v899 = vadd.f32 %v897, %v898
    %v900 = vmul.f32 %v878, 0.015625
    %v901 = vmul.f32 %v899, 0.015625
    %v902 = vmul.f32 %v900, %v900
    %v903 = vsub.f32 %v901, %v902
    %v904 = vmax.f32 %v903, 0.0
    %v905 = vsub.f32 %v812, %v900
    %v906 = vsub.f32 %v817, %v900
    %v907 = vsub.f32 %v822, %v900
    %v908 = vsub.f32 %v827, %v900
    %v909 = vsub.f32 %v832, %v900
    %v910 = vsub.f32 %v837, %v900
    %v911 = vsub.f32 %v842, %v900
    %v912 = vsub.f32 %v847, %v900
    %v913 = vadd.f32 %v904, 1e-05
    %v914 = vrsqrt.pop %v913
    %v915 = vmul.f32 %v905, %v914
    %v916 = vmul.f32 %v906, %v914
    %v917 = vmul.f32 %v907, %v914
    %v918 = vmul.f32 %v908, %v914
    %v919 = vmul.f32 %v909, %v914
    %v920 = vmul.f32 %v910, %v914
    %v921 = vmul.f32 %v911, %v914
    %v922 = vmul.f32 %v912, %v914
    %924 = vset.pattern.permute.xlu0 0
    %925 = vperm.xlu0 %924, %v850
    %v926 = vpop.permute.xlu0 %925
    %929 = vset.pattern.permute.xlu0 0
    %930 = vperm.xlu0 %929, %v851
    %v931 = vpop.permute.xlu0 %930
    %934 = vset.pattern.permute.xlu0 0
    %935 = vperm.xlu0 %934, %v852
    %v936 = vpop.permute.xlu0 %935
    %939 = vset.pattern.permute.xlu0 0
    %940 = vperm.xlu0 %939, %v853
    %v941 = vpop.permute.xlu0 %940
    %944 = vset.pattern.permute.xlu0 0
    %945 = vperm.xlu0 %944, %v854
    %v946 = vpop.permute.xlu0 %945
    %949 = vset.pattern.permute.xlu0 0
    %950 = vperm.xlu0 %949, %v855
    %v951 = vpop.permute.xlu0 %950
    %954 = vset.pattern.permute.xlu0 0
    %955 = vperm.xlu0 %954, %v856
    %v956 = vpop.permute.xlu0 %955
    %959 = vset.pattern.permute.xlu0 0
    %960 = vperm.xlu0 %959, %v857
    %v961 = vpop.permute.xlu0 %960
    %v963 = vmul.f32 %v915, %v926
    %v964 = vmul.f32 %v916, %v931
    %v965 = vmul.f32 %v917, %v936
    %v966 = vmul.f32 %v918, %v941
    %v967 = vmul.f32 %v919, %v946
    %v968 = vmul.f32 %v920, %v951
    %v969 = vmul.f32 %v921, %v956
    %v970 = vmul.f32 %v922, %v961
    %972 = vset.pattern.permute.xlu0 0
    %973 = vperm.xlu0 %972, %v858
    %v974 = vpop.permute.xlu0 %973
    %977 = vset.pattern.permute.xlu0 0
    %978 = vperm.xlu0 %977, %v859
    %v979 = vpop.permute.xlu0 %978
    %982 = vset.pattern.permute.xlu0 0
    %983 = vperm.xlu0 %982, %v860
    %v984 = vpop.permute.xlu0 %983
    %987 = vset.pattern.permute.xlu0 0
    %988 = vperm.xlu0 %987, %v861
    %v989 = vpop.permute.xlu0 %988
    %992 = vset.pattern.permute.xlu0 0
    %993 = vperm.xlu0 %992, %v862
    %v994 = vpop.permute.xlu0 %993
    %997 = vset.pattern.permute.xlu0 0
    %998 = vperm.xlu0 %997, %v863
    %v999 = vpop.permute.xlu0 %998
    %1002 = vset.pattern.permute.xlu0 0
    %1003 = vperm.xlu0 %1002, %v864
    %v1004 = vpop.permute.xlu0 %1003
    %1007 = vset.pattern.permute.xlu0 0
    %1008 = vperm.xlu0 %1007, %v865
    %v1009 = vpop.permute.xlu0 %1008
    %v1011 = vadd.f32 %v963, %v974
    %v1012 = vadd.f32 %v964, %v979
    %v1013 = vadd.f32 %v965, %v984
    %v1014 = vadd.f32 %v966, %v989
    %v1015 = vadd.f32 %v967, %v994
    %v1016 = vadd.f32 %v968, %v999
    %v1017 = vadd.f32 %v969, %v1004
    %v1018 = vadd.f32 %v970, %v1009
    %vm1019 = vcmp.gt.f32.partialorder %v1011, 0.0
    %vm1020 = vcmp.gt.f32.partialorder %v1012, 0.0
    %vm1021 = vcmp.gt.f32.partialorder %v1013, 0.0
    %vm1022 = vcmp.gt.f32.partialorder %v1014, 0.0
    %vm1023 = vcmp.gt.f32.partialorder %v1015, 0.0
    %vm1024 = vcmp.gt.f32.partialorder %v1016, 0.0
    %vm1025 = vcmp.gt.f32.partialorder %v1017, 0.0
    %vm1026 = vcmp.gt.f32.partialorder %v1018, 0.0
    %v1027 = vmin.f32 %v1011, 0.0
    %v1028 = vmin.f32 %v1012, 0.0
    %v1029 = vmin.f32 %v1013, 0.0
    %v1030 = vmin.f32 %v1014, 0.0
    %v1031 = vmin.f32 %v1015, 0.0
    %v1032 = vmin.f32 %v1016, 0.0
    %v1033 = vmin.f32 %v1017, 0.0
    %v1034 = vmin.f32 %v1018, 0.0
    %v1035 = vmul.f32 %v1027, 1.442695
    %v1036 = vpow.pop %v1035
    %v1037 = vmul.f32 %v1028, 1.442695
    %v1038 = vpow.pop %v1037
    %v1039 = vmul.f32 %v1029, 1.442695
    %v1040 = vpow.pop %v1039
    %v1041 = vmul.f32 %v1030, 1.442695
    %v1042 = vpow.pop %v1041
    %v1043 = vmul.f32 %v1031, 1.442695
    %v1044 = vpow.pop %v1043
    %v1045 = vmul.f32 %v1032, 1.442695
    %v1046 = vpow.pop %v1045
    %v1047 = vmul.f32 %v1033, 1.442695
    %v1048 = vpow.pop %v1047
    %v1049 = vmul.f32 %v1034, 1.442695
    %v1050 = vpow.pop %v1049
    %v1051 = vsub.f32 %v1036, 1.0
    %v1052 = vsub.f32 %v1038, 1.0
    %v1053 = vsub.f32 %v1040, 1.0
    %v1054 = vsub.f32 %v1042, 1.0
    %v1055 = vsub.f32 %v1044, 1.0
    %v1056 = vsub.f32 %v1046, 1.0
    %v1057 = vsub.f32 %v1048, 1.0
    %v1058 = vsub.f32 %v1050, 1.0
    %v1059 = vsel %vm1019, %v1011, %v1051
    %v1060 = vsel %vm1020, %v1012, %v1052
    %v1061 = vsel %vm1021, %v1013, %v1053
    %v1062 = vsel %vm1022, %v1014, %v1054
    %v1063 = vsel %vm1023, %v1015, %v1055
    %v1064 = vsel %vm1024, %v1016, %v1056
    %v1065 = vsel %vm1025, %v1017, %v1057
    %v1066 = vsel %vm1026, %v1018, %v1058
    %v1067 = vld [vmem:[%s9] sm:$0xff]
    %v1068 = vld [vmem:[%s9 + $0x8] sm:$0xff]
    %v1069 = vld [vmem:[%s9 + $0x10] sm:$0xff]
    %v1070 = vld [vmem:[%s9 + $0x18] sm:$0xff]
    %v1071 = vld [vmem:[%s9 + $0x20] sm:$0xff]
    %v1072 = vld [vmem:[%s9 + $0x28] sm:$0xff]
    %v1073 = vld [vmem:[%s9 + $0x30] sm:$0xff]
    %v1074 = vld [vmem:[%s9 + $0x38] sm:$0xff]
    %1076 = vset.pattern.permute.xlu0 0
    %1077 = vperm.xlu0 %1076, %v1067
    %v1078 = vpop.permute.xlu0 %1077
    %1081 = vset.pattern.permute.xlu0 0
    %1082 = vperm.xlu0 %1081, %v1068
    %v1083 = vpop.permute.xlu0 %1082
    %1086 = vset.pattern.permute.xlu0 0
    %1087 = vperm.xlu0 %1086, %v1069
    %v1088 = vpop.permute.xlu0 %1087
    %1091 = vset.pattern.permute.xlu0 0
    %1092 = vperm.xlu0 %1091, %v1070
    %v1093 = vpop.permute.xlu0 %1092
    %1096 = vset.pattern.permute.xlu0 0
    %1097 = vperm.xlu0 %1096, %v1071
    %v1098 = vpop.permute.xlu0 %1097
    %1101 = vset.pattern.permute.xlu0 0
    %1102 = vperm.xlu0 %1101, %v1072
    %v1103 = vpop.permute.xlu0 %1102
    %1106 = vset.pattern.permute.xlu0 0
    %1107 = vperm.xlu0 %1106, %v1073
    %v1108 = vpop.permute.xlu0 %1107
    %1111 = vset.pattern.permute.xlu0 0
    %1112 = vperm.xlu0 %1111, %v1074
    %v1113 = vpop.permute.xlu0 %1112
    %v1115 = vmul.f32 %v1059, %v1078
    %v1116 = vmul.f32 %v1060, %v1083
    %v1117 = vmul.f32 %v1061, %v1088
    %v1118 = vmul.f32 %v1062, %v1093
    %v1119 = vmul.f32 %v1063, %v1098
    %v1120 = vmul.f32 %v1064, %v1103
    %v1121 = vmul.f32 %v1065, %v1108
    %v1122 = vmul.f32 %v1066, %v1113
    %v1123 = vadd.f32 %v1115, %v1116
    %v1124 = vadd.f32 %v1123, %v1117
    %v1125 = vadd.f32 %v1124, %v1118
    %v1126 = vadd.f32 %v1125, %v1119
    %v1127 = vadd.f32 %v1126, %v1120
    %v1128 = vadd.f32 %v1127, %v1121
    %v1129 = vadd.f32 %v1128, %v1122
    %v1130 = vrot.slane %v1129, 4
    %v1131 = vadd.f32 %v1129, %v1130
    %v1132 = vrot.slane %v1131, 2
    %v1133 = vadd.f32 %v1131, %v1132
    %v1134 = vrot.slane %v1133, 1
    %v1135 = vadd.f32 %v1133, %v1134
    %v1136 = vld [vmem:[#allocation2] sm:$0x1]
    %1138 = vset.pattern.permute.xlu0 0
    %1139 = vperm.xlu0 %1138, %v1136
    %v1140 = vpop.permute.xlu0 %1139
    %v1142 = vlaneseq
    %v1143 = vshrl.u32 %v1142, 7
    %v1144 = vsub.s32 0, %v1143
    %v1145 = vrot.slane %v1140, %v1144
    %v1146 = vadd.f32 %v1135, %v1145
    %v1147 = vtanh.pop %v1146
    %v1148 = vadd.f32 %v1147, 1.0
    %v1149 = vmul.f32 %v1148, 2.0
    %v1150 = vadd.f32 %v1149, 1.0
    %v1151 = vmax.f32 %v1150, 1.0
    %v1152 = vmin.f32 %v1151, 5.0
    %1153 = vst [vmem:[#allocation3] sm:$0x1] %v1152
    // Predicated region
    $region46: #{tpu_custom_call.1} parent=1 // pred_check
      _
    $region47: #{tpu_custom_call.1} parent=1 // pred_check_branch
      %1155 = sbr.rel (0) target = $region49
    $region48: #{tpu_custom_call.1} parent=1 // pred_region
      %s1157 = ssub.s32 16, 16
      %1158 = vsyncadd [#allocation4], %s1157
      %s1160 = sshll.u32 [#allocation3], 4
      %s1161 = int_to_ptr.vmem [resolvable:$true] %s1160
      %1163 = dma.vmem_to_hbm [thread:$0]  %s1161, 16, %s11, [#allocation4]
    $region49: #{tpu_custom_call.1} parent=1 // pred_fallthru
      _
    // Predicated region
    $region50: #{tpu_custom_call.1} parent=1 // pred_check
      _
    $region51: #{tpu_custom_call.1} parent=1 // pred_check_branch
      %1165 = sbr.rel (0) target = $region53
    $region52: #{tpu_custom_call.1} parent=1 // pred_region
      %1166 = dma.done [#allocation4], 16
    $region53: #{tpu_custom_call.1} parent=1 // pred_fallthru
      _
    %1167 = vsyncpa [#allocation4], 1

</llo_original>
